<compile_context>
chip_gen: v6e
topology: v6e:2x2x1
jax: 0.10.0
libtpu: 0.0.40
codegen_flags: <defaults>
</compile_context>

<pallas_src>
import functools
import math

import jax
import jax.numpy as jnp
from jax.experimental import pallas as pl
from jax.experimental.pallas import tpu as pltpu


# ---------------------------------------------------------------------------
# helpers
# ---------------------------------------------------------------------------
def _pick_tile(n, preferred, min_steps=1):
    """Largest tile from `preferred` dividing n that still leaves >= min_steps
    grid steps (pipelining / megacore); falls back to the largest divisor."""
    fallback = None
    for t in preferred:
        if t <= n and n % t == 0:
            if fallback is None:
                fallback = t
            if n // t >= min_steps:
                return t
    return fallback if fallback is not None else n


def _tpu_generation():
    try:
        kind = jax.devices()[0].device_kind.lower()
    except Exception:
        return 0
    for g in (7, 6, 5, 4, 3, 2):
        if f"v{g}" in kind or f"tpu{g}" in kind:
            return g
    digits = [int(c) for c in kind if c.isdigit()]
    return digits[0] if digits else 0


def _default_flags():
    gen = _tpu_generation()
    use_bf16_matmul = gen >= 4                      # MXU is bf16-native
    score_dtype = jnp.bfloat16 if gen >= 6 else jnp.float32  # bf16 EUP v6e+
    return use_bf16_matmul, score_dtype


# ---------------------------------------------------------------------------
# Tiled linear projection:  Y = X @ W + b,  X: (M, Din) flattened
# ---------------------------------------------------------------------------
def _linear_kernel(x_ref, w_ref, b_ref, o_ref, *, mxu_dtype):
    x = x_ref[...].astype(mxu_dtype)
    w = w_ref[...].astype(mxu_dtype)
    y = jnp.dot(x, w, preferred_element_type=jnp.float32) + b_ref[...]
    o_ref[...] = y.astype(o_ref.dtype)


def linear(x2d, w, b, *, mxu_dtype=jnp.float32):
    M, Din = x2d.shape
    Dout = w.shape[1]
    # >= 4 grid steps so DMA/compute overlap and megacore sharding kick in.
    tm = _pick_tile(M, (512, 256, 128, 64, 32, 16, 8), min_steps=4)
    kernel = functools.partial(_linear_kernel, mxu_dtype=mxu_dtype)
    return pl.pallas_call(
        kernel,
        out_shape=jax.ShapeDtypeStruct((M, Dout), jnp.float32),
        grid_spec=pltpu.PrefetchScalarGridSpec(
            num_scalar_prefetch=0,
            grid=(M // tm,),
            in_specs=[
                pl.BlockSpec((tm, Din), lambda i: (i, 0)),
                pl.BlockSpec((Din, Dout), lambda i: (0, 0)),   # resident weights
                pl.BlockSpec((1, Dout), lambda i: (0, 0)),
            ],
            out_specs=pl.BlockSpec((tm, Dout), lambda i: (i, 0)),
        ),
        compiler_params=pltpu.CompilerParams(
            dimension_semantics=("parallel",)),
    )(x2d, w, b)


# ---------------------------------------------------------------------------
# Flash-style EfficientAdditiveAttention kernel (online softmax over kv tiles)
# ---------------------------------------------------------------------------
def _eaa_flash_kernel(q_ref, k_ref, v_ref, wcomb_ref, o_ref,
                      m_sc, l_sc, acc_sc, *, mxu_dtype, score_dtype):
    ki = pl.program_id(2)

    @pl.when(ki == 0)
    def _():
        m_sc[...] = jnp.full(m_sc.shape, -jnp.inf, dtype=jnp.float32)
        l_sc[...] = jnp.zeros(l_sc.shape, dtype=jnp.float32)
        acc_sc[...] = jnp.zeros(acc_sc.shape, dtype=jnp.float32)

    q = q_ref[0].astype(score_dtype)            # (tq, D)  pre-projected
    k = k_ref[0].astype(score_dtype)            # (tk, D)  pre-projected
    w = wcomb_ref[...].astype(score_dtype)      # (1, D)

    # e[i, j, d] = tanh(Q[i, d] + K[j, d])  — only a (tq, tk, D) tile.
    # bf16 on v6e/v7x (bf16 EUP on the binding unit, half-size temp), f32 on v5e.
    # TODO(synk): slab-loop over tk to keep this temp vreg-resident (needs bundle
    # dump verification of vst/vld slot pressure before changing).
    e = jnp.tanh(q[:, None, :] + k[None, :, :])
    # scores[i, j] = sum_d e[i, j, d] * w_comb[d]
    # (b_comb omitted: a constant shift cancels in the softmax.)
    scores = jnp.sum(e * w, axis=-1).astype(jnp.float32)      # (tq, tk)

    # online softmax update — statistics stay f32
    m_prev = m_sc[...]
    m_new = jnp.maximum(m_prev, jnp.max(scores, axis=-1, keepdims=True))
    alpha = jnp.exp(m_prev - m_new)
    p = jnp.exp(scores - m_new)                                 # (tq, tk) f32
    l_sc[...] = alpha * l_sc[...] + jnp.sum(p, axis=-1, keepdims=True)
    pv = jnp.dot(p.astype(mxu_dtype), v_ref[0].astype(mxu_dtype),
                 preferred_element_type=jnp.float32)            # (tq, D) f32 acc
    acc_sc[...] = alpha * acc_sc[...] + pv
    m_sc[...] = m_new

    # TODO(synk): dropout omitted — eval/inference semantics (identity).

    @pl.when(ki == pl.num_programs(2) - 1)
    def _():
        inv_l = pl.reciprocal(l_sc[...], approx=True)           # EUP vrcp
        o_ref[0] = (acc_sc[...] * inv_l).astype(o_ref.dtype)


def efficient_additive_attention(x, params, *, use_bf16_matmul=None,
                                 score_dtype=None, tile_q=128, tile_k=128):
    """Self-attention EfficientAdditiveAttention: x (B, L, D) -> (B, L, D)."""
    d_mm, d_sc = _default_flags()
    if use_bf16_matmul is None:
        use_bf16_matmul = d_mm
    if score_dtype is None:
        score_dtype = d_sc

    B, L, D = x.shape
    mxu_dtype = jnp.bfloat16 if use_bf16_matmul else jnp.float32

    # Fused QKV projection: one GEMM with W_qkv (D, 3D).  x is read from HBM
    # once, MXU N-dim = 3D, single kernel launch instead of three.
    qkv = linear(x.reshape(B * L, D), params["w_qkv"], params["b_qkv"],
                 mxu_dtype=mxu_dtype)
    Q = qkv[:, :D].reshape(B, L, D)
    K = qkv[:, D:2 * D].reshape(B, L, D)
    V = qkv[:, 2 * D:].reshape(B, L, D)

    tq = _pick_tile(L, (tile_q, 128, 64, 32, 16, 8))
    tk = _pick_tile(L, (tile_k, 128, 64, 32, 16, 8))
    grid = (B, L // tq, L // tk)

    kernel = functools.partial(_eaa_flash_kernel, mxu_dtype=mxu_dtype,
                               score_dtype=score_dtype)

    # VMEM budget derived from the per-step working set (v7x has 64 MiB/TC).
    temp_bytes = tq * tk * D * jnp.dtype(score_dtype).itemsize
    blk_bytes = 2 * 4 * (2 * tq * D + 2 * tk * D)   # double-buffered f32 blocks
    vmem_limit = int(min(4 * temp_bytes + blk_bytes + (12 << 20), 48 << 20))

    cost = pl.CostEstimate(
        flops=8 * B * L * L * D,
        transcendentals=B * L * L * D,              # the tanh dominates (EUP)
        bytes_accessed=4 * 4 * B * L * D,
    )

    return pl.pallas_call(
        kernel,
        out_shape=jax.ShapeDtypeStruct((B, L, D), x.dtype),
        grid_spec=pltpu.PrefetchScalarGridSpec(
            num_scalar_prefetch=0,
            grid=grid,
            in_specs=[
                pl.BlockSpec((1, tq, D), lambda b, qi, ki: (b, qi, 0)),  # Q
                pl.BlockSpec((1, tk, D), lambda b, qi, ki: (b, ki, 0)),  # K
                pl.BlockSpec((1, tk, D), lambda b, qi, ki: (b, ki, 0)),  # V
                pl.BlockSpec((1, D), lambda b, qi, ki: (0, 0)),          # w_comb
            ],
            out_specs=pl.BlockSpec((1, tq, D), lambda b, qi, ki: (b, qi, 0)),
            scratch_shapes=[
                pltpu.VMEM((tq, 1), jnp.float32),   # running max
                pltpu.VMEM((tq, 1), jnp.float32),   # running denominator
                pltpu.VMEM((tq, D), jnp.float32),   # f32 output accumulator
            ],
        ),
        compiler_params=pltpu.CompilerParams(
            dimension_semantics=("parallel", "parallel", "arbitrary"),
            vmem_limit_bytes=vmem_limit),
        cost_estimate=cost,
    )(Q, K, V, params["w_comb"])


# ---------------------------------------------------------------------------
# LayerNorm kernel (matches the PyTorch LayerNorm: unbiased std, /(std+eps))
# ---------------------------------------------------------------------------
def _layernorm_kernel(x_ref, a_ref, b_ref, o_ref, *, eps):
    x = x_ref[...]                                    # (tm, D) f32
    d = x.shape[-1]
    mean = jnp.mean(x, axis=-1, keepdims=True)
    xc = x - mean
    var = jnp.sum(xc * xc, axis=-1, keepdims=True) / (d - 1)   # unbiased (torch.std)
    std = jnp.sqrt(var)
    o_ref[...] = (a_ref[...] * xc / (std + eps) + b_ref[...]).astype(o_ref.dtype)


def layer_norm(x, a_2, b_2, *, eps=1e-6):
    B, L, D = x.shape
    M = B * L
    tm = _pick_tile(M, (512, 256, 128, 64, 32, 16, 8), min_steps=4)
    kernel = functools.partial(_layernorm_kernel, eps=eps)
    out = pl.pallas_call(
        kernel,
        out_shape=jax.ShapeDtypeStruct((M, D), x.dtype),
        grid_spec=pltpu.PrefetchScalarGridSpec(
            num_scalar_prefetch=0,
            grid=(M // tm,),
            in_specs=[
                pl.BlockSpec((tm, D), lambda i: (i, 0)),
                pl.BlockSpec((1, D), lambda i: (0, 0)),
                pl.BlockSpec((1, D), lambda i: (0, 0)),
            ],
            out_specs=pl.BlockSpec((tm, D), lambda i: (i, 0)),
        ),
        compiler_params=pltpu.CompilerParams(
            dimension_semantics=("parallel",)),
    )(x.reshape(M, D), a_2.reshape(1, D), b_2.reshape(1, D))
    return out.reshape(B, L, D)


# ---------------------------------------------------------------------------
# TCE forward: N layers + final LayerNorm
# ---------------------------------------------------------------------------
def tce_forward(x, layer_params, norm_params, *, use_bf16_matmul=None,
                score_dtype=None):
    # TODO(synk): TCE's per-layer block (`layer`) is not defined in the provided
    # spec; EfficientAdditiveAttention (self-attention) is used as the layer body.
    for p in layer_params:
        x = efficient_additive_attention(x, p,
                                         use_bf16_matmul=use_bf16_matmul,
                                         score_dtype=score_dtype)
    return layer_norm(x, norm_params["a_2"], norm_params["b_2"],
                      eps=norm_params["eps"])


# ---------------------------------------------------------------------------
# Parameter construction (PyTorch Linear shapes, fused + pre-transposed)
# ---------------------------------------------------------------------------
def init_eaa_params(key, d_model):
    ks = jax.random.split(key, 12)
    bound = 1.0 / math.sqrt(d_model)
    u = lambda k, shape: jax.random.uniform(k, shape, jnp.float32, -bound, bound)

    Wq, bq = u(ks[0], (d_model, d_model)), u(ks[1], (d_model,))
    Wk, bk = u(ks[2], (d_model, d_model)), u(ks[3], (d_model,))
    Wv, bv = u(ks[4], (d_model, d_model)), u(ks[5], (d_model,))
    Wd, bd = u(ks[6], (1, d_model)), u(ks[7], (1,))
    Ws, bs = u(ks[8], (1, d_model)), u(ks[9], (1,))
    Wt, bt = u(ks[10], (1, d_model)), u(ks[11], (1,))

    scale = math.sqrt(d_model)
    w_comb = (1.0 / scale) + Wd[0] + Ws[0] + Wt[0]      # (D,)
    # b_comb = bd + bs + bt cancels under softmax -> not needed by the kernel.

    params = {
        # Fused QKV weights: W_qkv (D, 3D), b_qkv (1, 3D) — single projection GEMM.
        "w_qkv": jnp.concatenate([Wq.T, Wk.T, Wv.T], axis=1),
        "b_qkv": jnp.concatenate([bq, bk, bv]).reshape(1, 3 * d_model),
        "w_comb": w_comb.reshape(1, d_model),
    }
    raw = (Wq, bq, Wk, bk, Wv, bv, Wd, bd, Ws, bs, Wt, bt)
    return params, raw


# ---------------------------------------------------------------------------
# Pure-JAX references
# ---------------------------------------------------------------------------
def eaa_reference(x, raw, d_model):
    Wq, bq, Wk, bk, Wv, bv, Wd, bd, Ws, bs, Wt, bt = raw
    scale = math.sqrt(d_model)
    Q = x @ Wq.T + bq
    K = x @ Wk.T + bk
    V = x @ Wv.T + bv
    e = jnp.tanh(Q[:, :, None, :] + K[:, None, :, :])      # (B, Lq, Lk, D)
    base = e.sum(-1) / scale
    delta = (e @ Wd.T)[..., 0] + bd[0]
    sigma = (e @ Ws.T)[..., 0] + bs[0]
    theta = (e @ Wt.T)[..., 0] + bt[0]
    scores = base + delta + sigma + theta
    attn = jax.nn.softmax(scores, axis=-1)
    return attn @ V


def layer_norm_reference(x, a, b, eps):
    mean = x.mean(-1, keepdims=True)
    std = jnp.std(x, axis=-1, keepdims=True, ddof=1)
    return a * (x - mean) / (std + eps) + b


def tce_reference(x, raw_list, a, b, eps, d_model):
    for raw in raw_list:
        x = eaa_reference(x, raw, d_model)
    return layer_norm_reference(x, a, b, eps)


# ---------------------------------------------------------------------------
if __name__ == "__main__":
    B, L, D, N_LAYERS = 2, 256, 128, 2   # lane-dense D, enough tiles to pipeline

    key = jax.random.PRNGKey(0)
    kx, k1, k2 = jax.random.split(key, 3)
    x = jax.random.normal(kx, (B, L, D), jnp.float32)

    layer_params, layer_raw = [], []
    for kp in (k1, k2)[:N_LAYERS]:
        p, raw = init_eaa_params(kp, D)
        layer_params.append(p)
        layer_raw.append(raw)

    a2 = jnp.ones((D,), jnp.float32)
    b2 = jnp.zeros((D,), jnp.float32)
    eps = 1e-6
    norm = {"a_2": a2, "b_2": b2, "eps": eps}

    ref_attn = eaa_reference(x, layer_raw[0], D)

    # 1) single attention layer, full-f32 path (strict check)
    out_f32 = jax.block_until_ready(
        efficient_additive_attention(x, layer_params[0],
                                     use_bf16_matmul=False,
                                     score_dtype=jnp.float32))
    assert out_f32.shape == (B, L, D)
    assert jnp.allclose(out_f32, ref_attn, atol=2e-3, rtol=2e-3), \
        "attention (f32) mismatch vs reference"

    # 2) single attention layer, generation-default mixed precision
    #    (bf16 MXU; bf16 tanh path on v6e/v7x, f32 on v5e), loose tolerance
    out_fast = jax.block_until_ready(
        efficient_additive_attention(x, layer_params[0]))
    assert jnp.allclose(out_fast, ref_attn, atol=5e-2, rtol=5e-2), \
        "attention (mixed-precision default) mismatch vs reference"

    # 3) full TCE, f32 path (strict-ish)
    ref_tce = tce_reference(x, layer_raw, a2, b2, eps, D)
    out_tce_f32 = jax.block_until_ready(
        tce_forward(x, layer_params, norm,
                    use_bf16_matmul=False, score_dtype=jnp.float32))
    assert out_tce_f32.shape == (B, L, D)
    assert jnp.allclose(out_tce_f32, ref_tce, atol=1e-2, rtol=1e-2), \
        "TCE (f32) mismatch vs reference"

    # 4) full TCE, generation-default mixed precision (loose)
    out_tce_fast = jax.block_until_ready(tce_forward(x, layer_params, norm))
    assert jnp.allclose(out_tce_fast, ref_tce, atol=1e-1, rtol=1e-1), \
        "TCE (mixed-precision default) mismatch vs reference"

    print("KERNEL_OK")
</pallas_src>

<mosaic_0001>
module attributes {stable_mosaic.version = 11 : i64} {
  func.func @_linear_kernel(%arg0: i32, %arg1: memref<128x128xf32, #tpu.memory_space<vmem>>, %arg2: memref<128x384xf32, #tpu.memory_space<vmem>>, %arg3: memref<1x384xf32, #tpu.memory_space<vmem>>, %arg4: memref<128x384xf32, #tpu.memory_space<vmem>>) attributes {dimension_semantics = [#tpu.dimension_semantics<parallel>], iteration_bounds = array<i64: 4>, scalar_prefetch = 0 : i64, scratch_operands = 0 : i64, tpu.core_type = #tpu.core_type<tc>, window_params = [{transform_indices = @transform_0, window_bounds = array<i64: 128, 128>}, {pipeline_mode = #tpu.pipeline_mode<synchronous>, transform_indices = @transform_1, window_bounds = array<i64: 128, 384>}, {pipeline_mode = #tpu.pipeline_mode<synchronous>, transform_indices = @transform_2, window_bounds = array<i64: 1, 384>}, {transform_indices = @transform_3, window_bounds = array<i64: 128, 384>}]} {
    %c0 = arith.constant 0 : index
    %c0_0 = arith.constant 0 : index
    %0 = vector.load %arg1[%c0, %c0_0] : memref<128x128xf32, #tpu.memory_space<vmem>>, vector<128x128xf32>
    %c0_1 = arith.constant 0 : index
    %c0_2 = arith.constant 0 : index
    %1 = vector.load %arg2[%c0_1, %c0_2] : memref<128x384xf32, #tpu.memory_space<vmem>>, vector<128x384xf32>
    %cst = arith.constant dense<0.000000e+00> : vector<128x384xf32>
    %2 = tpu.matmul %0, %1, %cst {dimension_numbers = #tpu.dot_dimension_numbers<[1], [0], [0], [1], [0, 0, 1, 1], [], []>} : vector<128x128xf32>, vector<128x384xf32>, vector<128x384xf32> -> vector<128x384xf32>
    %c0_3 = arith.constant 0 : index
    %c0_4 = arith.constant 0 : index
    %3 = vector.load %arg3[%c0_3, %c0_4] : memref<1x384xf32, #tpu.memory_space<vmem>>, vector<1x384xf32>
    %4 = vector.broadcast %3 : vector<1x384xf32> to vector<128x384xf32>
    %5 = arith.addf %2, %4 : vector<128x384xf32>
    %c0_5 = arith.constant 0 : index
    %c0_6 = arith.constant 0 : index
    %6 = vector.load %arg4[%c0_5, %c0_6] : memref<128x384xf32, #tpu.memory_space<vmem>>, vector<128x384xf32>
    tpu.vector_store %arg4[%c0_5, %c0_6], %5 {strides = array<i32>} : memref<128x384xf32, #tpu.memory_space<vmem>>, vector<128x384xf32>,
    return
  }
  func.func @transform_0(%arg0: i32) -> (i32, i32) {
    %c0_i32 = arith.constant 0 : i32
    %c0_i32_0 = arith.constant 0 : i32
    return %arg0, %c0_i32 : i32, i32
  }
  func.func @transform_1(%arg0: i32) -> (i32, i32) {
    %c0_i32 = arith.constant 0 : i32
    %c0_i32_0 = arith.constant 0 : i32
    %c0_i32_1 = arith.constant 0 : i32
    return %c0_i32, %c0_i32_0 : i32, i32
  }
  func.func @transform_2(%arg0: i32) -> (i32, i32) {
    %c0_i32 = arith.constant 0 : i32
    %c0_i32_0 = arith.constant 0 : i32
    %c0_i32_1 = arith.constant 0 : i32
    return %c0_i32, %c0_i32_0 : i32, i32
  }
  func.func @transform_3(%arg0: i32) -> (i32, i32) {
    %c0_i32 = arith.constant 0 : i32
    %c0_i32_0 = arith.constant 0 : i32
    return %arg0, %c0_i32 : i32, i32
  }
}

</mosaic_0001>

<llo_original>
// kernel: tpu_custom_call.1
$region0: #{tpu_custom_call.1}
  #allocation0 [shape = 'u32[]', space=smem, size = 0x4, offset = 0x4, fixed_abs, tag = 'smem constant byte address 0x4 - core index']
  #allocation1 [shape = 'u32[144,128]{1,0:T(1,128)}', space=vmem, size = 0x12000, scoped, tag = 'internal scratch']
  %s0 = inlined_call_operand.hbm [shape: f32[512,128], index: 0, kind: input, shape index: {}]
  %s1 = inlined_call_operand.hbm [shape: f32[128,384], index: 1, kind: input, shape index: {}]
  %s2 = inlined_call_operand.vmem [shape: f32[1,384], index: 2, kind: input, shape index: {}]
  %s3 = inlined_call_operand.hbm [shape: f32[512,384], index: 3, kind: output, shape index: {}]
  %s4 = sld [smem:[#allocation0]]
  $region53: #{tpu_custom_call.1} parent=0
    _
  %s6 = ssub.s32 1, %s4
  %s7 = scalar_select 0, %s6, %s4
  $region1: #{tpu_custom_call.1} parent=0
    #allocation2 [shape = 'u8[131072]{0}', space=vmem, size = 0x20000, scoped, tag = 'input window, operand 0']
    #allocation3 [shape = 's32[2]{0}', space=sflag, size = 0x8, scoped, tag = 'scoped memory for tpu_custom_call.1']
    #allocation4 [shape = 's32[2]{0}', space=sflag, size = 0x8, scoped, tag = 'scoped memory for tpu_custom_call.1']
    #allocation5 [shape = 'u8[196608]{0}', space=vmem, size = 0x30000, scoped, tag = 'input window, operand 1, single buffered']
    #allocation6 [shape = 's32[1]{0}', space=sflag, size = 0x4, scoped, tag = 'scoped memory for tpu_custom_call.1']
    #allocation7 [shape = 'u8[393216]{0}', space=vmem, size = 0x60000, scoped, tag = 'output window, operand 0']
    %8 = vsyncpa [#allocation3], 0
    %s9 = scalar_lea.sflag [#allocation3], 1
    %10 = vsyncpa %s9, 0
    %11 = vsyncpa [#allocation6], 0
    %12 = vsyncpa [#allocation4], 0
    %s13 = scalar_lea.sflag [#allocation4], 1
    %14 = vsyncpa %s13, 0
    loop: start=0, step=1, limit=6
    $region2: #{tpu_custom_call.1} parent=1 // loop_pre_header
      _
    $region3: #{tpu_custom_call.1} parent=1 // loop_header
      %s16 = sphi 0, %s20
      %p17 = scmp.ge.s32.totalorder %s16, 6
      %s26 = sphi 0, %s28
      %s29 = sphi 0, %s26
      %s30 = sphi 0, %s29
      %s46 = sphi 0, %s30
      %s50 = sphi 0, %s50
      %s52 = sphi 0, %s50
      %s53 = sphi 0, %s52
      %s67 = sphi 0, %s53
      %s71 = sphi 0, %s71
      %s73 = sphi 0, %s71
      %s74 = sphi 0, %s73
      %s88 = sphi 0, %s74
      %s94 = sphi 0, %s96
      %s97 = sphi 0, %s94
      %s98 = sphi 0, %s97
      %s114 = sphi 0, %s98
    $region4: #{tpu_custom_call.1} parent=1 // loop_header_branch
      %19 = sbr.rel (%p17) target = $region8
    $region5: #{tpu_custom_call.1} parent=1 // loop_body
      %s21 = ssub.s32 %s16, 1
      %s22 = ssub.s32 %s16, 2
      %s23 = sadd.s32 %s16, 1
      %s24 = ssub.s32 %s16, %s23
      %p25 = scmp.eq.s32.totalorder %s24, 0
      %s27 = sadd.s32 %s26, 1
      %s28 = scalar_select %p25, %s26, %s27
      %p31 = pneg %p25
      %p32 = scmp.eq.s32.totalorder %s16, 3
      %p33 = por %p31, %p32
      %p34 = scmp.ne.s32.totalorder %s26, %s29
      %p35 = scmp.eq.s32.totalorder %s16, 0
      %p36 = por %p34, %p35
      %p37 = scmp.ne.s32.totalorder %s26, %s29
      %p38 = scmp.eq.s32.totalorder %s21, 3
      %p39 = por %p37, %p38
      %p40 = scmp.ne.s32.totalorder %s29, %s30
      %p41 = scmp.eq.s32.totalorder %s21, 0
      %p42 = por %p40, %p41
      %p43 = scmp.ne.s32.totalorder %s29, %s30
      %p44 = scmp.eq.s32.totalorder %s22, 3
      %p45 = por %p43, %p44
      %p47 = scmp.ne.s32.totalorder %s30, %s46
      %p48 = scmp.eq.s32.totalorder %s22, 0
      %p49 = por %p47, %p48
      %s51 = sadd.s32 %s50, 1
      %p54 = scmp.eq.s32.totalorder %s16, 3
      %p55 = scmp.ne.s32.totalorder %s50, %s52
      %p56 = scmp.eq.s32.totalorder %s16, 0
      %p57 = por %p55, %p56
      %p58 = scmp.ne.s32.totalorder %s50, %s52
      %p59 = scmp.eq.s32.totalorder %s21, 3
      %p60 = por %p58, %p59
      %p61 = scmp.ne.s32.totalorder %s52, %s53
      %p62 = scmp.eq.s32.totalorder %s21, 0
      %p63 = por %p61, %p62
      %p64 = scmp.ne.s32.totalorder %s52, %s53
      %p65 = scmp.eq.s32.totalorder %s22, 3
      %p66 = por %p64, %p65
      %p68 = scmp.ne.s32.totalorder %s53, %s67
      %p69 = scmp.eq.s32.totalorder %s22, 0
      %p70 = por %p68, %p69
      %s72 = sadd.s32 %s71, 1
      %p75 = scmp.eq.s32.totalorder %s16, 3
      %p76 = scmp.ne.s32.totalorder %s71, %s73
      %p77 = scmp.eq.s32.totalorder %s16, 0
      %p78 = por %p76, %p77
      %p79 = scmp.ne.s32.totalorder %s71, %s73
      %p80 = scmp.eq.s32.totalorder %s21, 3
      %p81 = por %p79, %p80
      %p82 = scmp.ne.s32.totalorder %s73, %s74
      %p83 = scmp.eq.s32.totalorder %s21, 0
      %p84 = por %p82, %p83
      %p85 = scmp.ne.s32.totalorder %s73, %s74
      %p86 = scmp.eq.s32.totalorder %s22, 3
      %p87 = por %p85, %p86
      %p89 = scmp.ne.s32.totalorder %s74, %s88
      %p90 = scmp.eq.s32.totalorder %s22, 0
      %p91 = por %p89, %p90
      %s92 = ssub.s32 %s16, %s23
      %p93 = scmp.eq.s32.totalorder %s92, 0
      %s95 = sadd.s32 %s94, 1
      %s96 = scalar_select %p93, %s94, %s95
      %p99 = pneg %p93
      %p100 = scmp.eq.s32.totalorder %s16, 3
      %p101 = por %p99, %p100
      %p102 = scmp.ne.s32.totalorder %s94, %s97
      %p103 = scmp.eq.s32.totalorder %s16, 0
      %p104 = por %p102, %p103
      %p105 = scmp.ne.s32.totalorder %s94, %s97
      %p106 = scmp.eq.s32.totalorder %s21, 3
      %p107 = por %p105, %p106
      %p108 = scmp.ne.s32.totalorder %s97, %s98
      %p109 = scmp.eq.s32.totalorder %s21, 0
      %p110 = por %p108, %p109
      %p111 = scmp.ne.s32.totalorder %s97, %s98
      %p112 = scmp.eq.s32.totalorder %s22, 3
      %p113 = por %p111, %p112
      %p115 = scmp.ne.s32.totalorder %s98, %s114
      %p116 = scmp.eq.s32.totalorder %s22, 0
      %p117 = por %p115, %p116
      %p118 = scmp.le.s32.totalorder 1, %s16
      %p119 = scmp.lt.s32.totalorder %s16, 5
      %p120 = pnand %p118, %p119
      %p121 = pneg %p120
      // Predicated region
      $region9: #{tpu_custom_call.1} parent=5 // pred_check
        _
      $region10: #{tpu_custom_call.1} parent=5 // pred_check_branch
        %123 = sbr.rel (%p120) target = $region12
      $region11: #{tpu_custom_call.1} parent=5 // pred_region
        %s124 = ssub.s32 %s16, 1
        // Predicated region
        $region13: #{tpu_custom_call.1} parent=11 // pred_check
          %p125 = pneg %p63
        $region14: #{tpu_custom_call.1} parent=11 // pred_check_branch
          %127 = sbr.rel (%p125) target = $region16
        $region15: #{tpu_custom_call.1} parent=11 // pred_region
          %s129 = ssub.s32 6144, 6144
          %130 = vsyncadd [#allocation6], %s129
          %s131 = sshll.u32 [#allocation5], 4
          %s132 = int_to_ptr.vmem [resolvable:$true] %s131
          %137 = dma.hbm_to_vmem [thread:$0]  %s1, 6144, %s132, [#allocation6], 384, 384, 24
        $region16: #{tpu_custom_call.1} parent=11 // pred_fallthru
          _
        // Predicated region
        $region17: #{tpu_custom_call.1} parent=11 // pred_check
          %p138 = pneg %p84
        $region18: #{tpu_custom_call.1} parent=11 // pred_check_branch
          %140 = sbr.rel (%p138) target = $region20
        $region19: #{tpu_custom_call.1} parent=11 // pred_region
          _
        $region20: #{tpu_custom_call.1} parent=11 // pred_fallthru
          _
      $region12: #{tpu_custom_call.1} parent=5 // pred_fallthru
        _
      %p141 = scmp.lt.s32.totalorder %s16, 4
      // Predicated region
      $region21: #{tpu_custom_call.1} parent=5 // pred_check
        %p142 = pneg %p141
      $region22: #{tpu_custom_call.1} parent=5 // pred_check_branch
        %144 = sbr.rel (%p142) target = $region24
      $region23: #{tpu_custom_call.1} parent=5 // pred_region
        // Predicated region
        $region25: #{tpu_custom_call.1} parent=23 // pred_check
          %p145 = pneg %p36
        $region26: #{tpu_custom_call.1} parent=23 // pred_check_branch
          %147 = sbr.rel (%p145) target = $region28
        $region27: #{tpu_custom_call.1} parent=23 // pred_region
          %s148 = sand.u32 %s26, 1
          %s149 = scalar_lea.sflag [#allocation3], %s148
          %s150 = sand.u32 %s26, 1
          %s151 = smul.addr %s150, 128
          %s152 = scalar_lea.vmem [#allocation2], %s151
          %s153 = smul.u32 16, %s16
          %s155 = ssub.s32 2048, 2048
          %156 = vsyncadd %s149, %s155
          %s157 = smul.addr %s153, 128
          %s158 = scalar_lea.hbm %s0, %s157
          %s159 = sshll.u32 %s152, 4
          %s160 = int_to_ptr.vmem [resolvable:$true] %s159
          %165 = dma.hbm_to_vmem [thread:$0]  %s158, 2048, %s160, %s149, 128, 128, 8
        $region28: #{tpu_custom_call.1} parent=23 // pred_fallthru
          _
      $region24: #{tpu_custom_call.1} parent=5 // pred_fallthru
        _
      %p166 = scmp.le.s32.totalorder 1, %s16
      %p167 = scmp.lt.s32.totalorder %s16, 5
      %p168 = pnand %p166, %p167
      %p169 = pneg %p168
      // Predicated region
      $region29: #{tpu_custom_call.1} parent=5 // pred_check
        _
      $region30: #{tpu_custom_call.1} parent=5 // pred_check_branch
        %171 = sbr.rel (%p168) target = $region32
      $region31: #{tpu_custom_call.1} parent=5 // pred_region
        %s172 = ssub.s32 %s16, 1
        %s173 = sand.u32 %s29, 1
        %s174 = scalar_lea.sflag [#allocation3], %s173
        %s175 = sand.u32 %s29, 1
        %s176 = smul.addr %s175, 128
        %s177 = scalar_lea.vmem [#allocation2], %s176
        // Predicated region
        $region33: #{tpu_custom_call.1} parent=31 // pred_check
          %p178 = pneg %p42
        $region34: #{tpu_custom_call.1} parent=31 // pred_check_branch
          %180 = sbr.rel (%p178) target = $region36
        $region35: #{tpu_custom_call.1} parent=31 // pred_region
          %181 = dma.done %s174, 2048
        $region36: #{tpu_custom_call.1} parent=31 // pred_fallthru
          _
        // Predicated region
        $region37: #{tpu_custom_call.1} parent=31 // pred_check
          %p182 = pneg %p63
        $region38: #{tpu_custom_call.1} parent=31 // pred_check_branch
          %184 = sbr.rel (%p182) target = $region40
        $region39: #{tpu_custom_call.1} parent=31 // pred_region
          %185 = dma.done [#allocation6], 6144
        $region40: #{tpu_custom_call.1} parent=31 // pred_fallthru
          _
        %s186 = sand.u32 %s29, 1
        %s187 = scalar_lea.sflag [#allocation3], %s186
        %s188 = sand.u32 %s29, 1
        %s189 = smul.addr %s188, 128
        %s190 = scalar_lea.vmem [#allocation2], %s189
        %p191 = pneg %p42
        %p192 = pneg %p39
        %p193 = pneg %p63
        %p194 = pneg %p60
        %p195 = pneg %p84
        %p196 = pneg %p81
        %p197 = pneg %p110
        %p198 = pneg %p107
        %s199 = sand.u32 %s97, 1
        %s200 = scalar_lea.sflag [#allocation4], %s199
        %s201 = sand.u32 %s97, 1
        %s202 = smul.addr %s201, 384
        %s203 = scalar_lea.vmem [#allocation7], %s202
        %s204 = smul.u32 16, %s21
        %s205 = smul.u32 16, %s21
        %v206 = vld [vmem:[%s177] sm:$0xff]
        %v207 = vld [vmem:[%s177 + $0x8] sm:$0xff]
        %v208 = vld [vmem:[%s177 + $0x10] sm:$0xff]
        %v209 = vld [vmem:[%s177 + $0x18] sm:$0xff]
        %v210 = vld [vmem:[%s177 + $0x20] sm:$0xff]
        %v211 = vld [vmem:[%s177 + $0x28] sm:$0xff]
        %v212 = vld [vmem:[%s177 + $0x30] sm:$0xff]
        %v213 = vld [vmem:[%s177 + $0x38] sm:$0xff]
        %v214 = vld [vmem:[%s177 + $0x40] sm:$0xff]
        %v215 = vld [vmem:[%s177 + $0x48] sm:$0xff]
        %v216 = vld [vmem:[%s177 + $0x50] sm:$0xff]
        %v217 = vld [vmem:[%s177 + $0x58] sm:$0xff]
        %v218 = vld [vmem:[%s177 + $0x60] sm:$0xff]
        %v219 = vld [vmem:[%s177 + $0x68] sm:$0xff]
        %v220 = vld [vmem:[%s177 + $0x70] sm:$0xff]
        %v221 = vld [vmem:[%s177 + $0x78] sm:$0xff]
        %v222 = vld [vmem:[#allocation5] sm:$0xff]
        %v223 = vld [vmem:[#allocation5 + $0x8] sm:$0xff]
        %v224 = vld [vmem:[#allocation5 + $0x10] sm:$0xff]
        %v225 = vld [vmem:[#allocation5 + $0x18] sm:$0xff]
        %v226 = vld [vmem:[#allocation5 + $0x20] sm:$0xff]
        %v227 = vld [vmem:[#allocation5 + $0x28] sm:$0xff]
        %v228 = vld [vmem:[#allocation5 + $0x30] sm:$0xff]
        %v229 = vld [vmem:[#allocation5 + $0x38] sm:$0xff]
        %v230 = vld [vmem:[#allocation5 + $0x40] sm:$0xff]
        %v231 = vld [vmem:[#allocation5 + $0x48] sm:$0xff]
        %v232 = vld [vmem:[#allocation5 + $0x50] sm:$0xff]
        %v233 = vld [vmem:[#allocation5 + $0x58] sm:$0xff]
        %v234 = vld [vmem:[#allocation5 + $0x60] sm:$0xff]
        %v235 = vld [vmem:[#allocation5 + $0x68] sm:$0xff]
        %v236 = vld [vmem:[#allocation5 + $0x70] sm:$0xff]
        %v237 = vld [vmem:[#allocation5 + $0x78] sm:$0xff]
        %v238 = vld [vmem:[#allocation5 + $0x80] sm:$0xff]
        %v239 = vld [vmem:[#allocation5 + $0x88] sm:$0xff]
        %v240 = vld [vmem:[#allocation5 + $0x90] sm:$0xff]
        %v241 = vld [vmem:[#allocation5 + $0x98] sm:$0xff]
        %v242 = vld [vmem:[#allocation5 + $0xa0] sm:$0xff]
        %v243 = vld [vmem:[#allocation5 + $0xa8] sm:$0xff]
        %v244 = vld [vmem:[#allocation5 + $0xb0] sm:$0xff]
        %v245 = vld [vmem:[#allocation5 + $0xb8] sm:$0xff]
        %v246 = vld [vmem:[#allocation5 + $0xc0] sm:$0xff]
        %v247 = vld [vmem:[#allocation5 + $0xc8] sm:$0xff]
        %v248 = vld [vmem:[#allocation5 + $0xd0] sm:$0xff]
        %v249 = vld [vmem:[#allocation5 + $0xd8] sm:$0xff]
        %v250 = vld [vmem:[#allocation5 + $0xe0] sm:$0xff]
        %v251 = vld [vmem:[#allocation5 + $0xe8] sm:$0xff]
        %v252 = vld [vmem:[#allocation5 + $0xf0] sm:$0xff]
        %v253 = vld [vmem:[#allocation5 + $0xf8] sm:$0xff]
        %v254 = vld [vmem:[#allocation5 + $0x100] sm:$0xff]
        %v255 = vld [vmem:[#allocation5 + $0x108] sm:$0xff]
        %v256 = vld [vmem:[#allocation5 + $0x110] sm:$0xff]
        %v257 = vld [vmem:[#allocation5 + $0x118] sm:$0xff]
        %v258 = vld [vmem:[#allocation5 + $0x120] sm:$0xff]
        %v259 = vld [vmem:[#allocation5 + $0x128] sm:$0xff]
        %v260 = vld [vmem:[#allocation5 + $0x130] sm:$0xff]
        %v261 = vld [vmem:[#allocation5 + $0x138] sm:$0xff]
        %v262 = vld [vmem:[#allocation5 + $0x140] sm:$0xff]
        %v263 = vld [vmem:[#allocation5 + $0x148] sm:$0xff]
        %v264 = vld [vmem:[#allocation5 + $0x150] sm:$0xff]
        %v265 = vld [vmem:[#allocation5 + $0x158] sm:$0xff]
        %v266 = vld [vmem:[#allocation5 + $0x160] sm:$0xff]
        %v267 = vld [vmem:[#allocation5 + $0x168] sm:$0xff]
        %v268 = vld [vmem:[#allocation5 + $0x170] sm:$0xff]
        %v269 = vld [vmem:[#allocation5 + $0x178] sm:$0xff]
        %v270 = vld [vmem:[%s2] sm:$0x7]
        %v272 = vlaneseq
        %v273 = vshrl.u32 %v272, 7
        %v274 = vsub.s32 0, %v273
        %v275 = vrot.slane %v270, %v274
        %v276 = vlaneseq
        %v277 = vshrl.u32 %v276, 7
        %v278 = vsub.s32 1, %v277
        %v279 = vrot.slane %v270, %v278
        %v280 = vlaneseq
        %v281 = vshrl.u32 %v280, 7
        %v282 = vsub.s32 2, %v281
        %v283 = vrot.slane %v270, %v282
        %287 = vmatprep.subr.mxu0 %v268
        %288 = vmatpush1.msra.mxu0 %v267
        %289 = vmatprep.subr.mxu0 %v265
        %290 = vmatpush1.msra.mxu0 %v264
        %291 = vmatprep.subr.mxu0 %v262
        %292 = vmatpush1.msra.mxu0 %v261
        %293 = vmatprep.subr.mxu0 %v259
        %294 = vmatpush1.msra.mxu0 %v258
        %295 = vmatprep.subr.mxu0 %v256
        %296 = vmatpush1.msra.mxu0 %v255
        %297 = vmatprep.subr.mxu0 %v253
        %298 = vmatpush1.msra.mxu0 %v252
        %299 = vmatprep.subr.mxu0 %v250
        %300 = vmatpush1.msra.mxu0 %v249
        %301 = vmatprep.subr.mxu0 %v247
        %302 = vmatpush1.msra.mxu0 %v246
        %303 = vmatprep.subr.mxu0 %v244
        %304 = vmatpush1.msra.mxu0 %v243
        %305 = vmatprep.subr.mxu0 %v241
        %306 = vmatpush1.msra.mxu0 %v240
        %307 = vmatprep.subr.mxu0 %v238
        %308 = vmatpush1.msra.mxu0 %v237
        %309 = vmatprep.subr.mxu0 %v235
        %310 = vmatpush1.msra.mxu0 %v234
        %311 = vmatprep.subr.mxu0 %v232
        %312 = vmatpush1.msra.mxu0 %v231
        %313 = vmatprep.subr.mxu0 %v229
        %314 = vmatpush1.msra.mxu0 %v228
        %315 = vmatprep.subr.mxu0 %v226
        %316 = vmatpush1.msra.mxu0 %v225
        %317 = vmatprep.subr.mxu0 %v223
        %318 = vmatpush1.msra.mxu0 %v222
        %319 = vmatprep.subr.mxu0 0.0
        %320 = vmatpush2.msra.mxu0 0.0
        %321 = vmatprep.subr.mxu0 0.0
        %322 = vmatpush2.msra.mxu0 0.0
        %323 = vmatprep.subr.mxu0 0.0
        %324 = vmatpush2.msra.mxu0 0.0
        %325 = vmatprep.subr.mxu0 0.0
        %326 = vmatpush2.msra.mxu0 0.0
        %327 = vmatprep.subr.mxu0 0.0
        %328 = vmatpush2.msra.mxu0 0.0
        %329 = vmatprep.subr.mxu0 0.0
        %330 = vmatpush2.msra.mxu0 0.0
        %331 = vmatprep.subr.mxu0 0.0
        %332 = vmatpush2.msra.mxu0 0.0
        %333 = vmatprep.subr.mxu0 0.0
        %334 = vmatpush2.msra.mxu0 0.0
        %335 = vmatprep.subr.mxu0 0.0
        %336 = vmatpush2.msra.mxu0 0.0
        %337 = vmatprep.subr.mxu0 0.0
        %338 = vmatpush2.msra.mxu0 0.0
        %339 = vmatprep.subr.mxu0 0.0
        %340 = vmatpush2.msra.mxu0 0.0
        %341 = vmatprep.subr.mxu0 0.0
        %342 = vmatpush2.msra.mxu0 0.0
        %343 = vmatprep.subr.mxu0 0.0
        %344 = vmatpush2.msra.mxu0 0.0
        %345 = vmatprep.subr.mxu0 0.0
        %346 = vmatpush2.msra.mxu0 0.0
        %347 = vmatprep.subr.mxu0 0.0
        %348 = vmatpush2.msra.mxu0 0.0
        %349 = vmatprep.subr.mxu0 0.0
        %350 = vmatpush2.msra.mxu0 0.0
        %351 = vmatprep.mubr.f32.mxu0 0.0
        %352 = vmatmul.mubr.f32.gmra.mxu0 %v206
        %v353 = vpop.f32.mrf.mxu0
        %v354 = vadd.f32 %v275, %v353
        %v355 = vpop.f32.mrf.mxu0
        %v356 = vadd.f32 %v279, %v355
        %357 = vmatprep.mubr.f32.mxu0 0.0
        %358 = vmatmul.mubr.f32.gmra.mxu0 %v207
        %v359 = vpop.f32.mrf.mxu0
        %v360 = vadd.f32 %v275, %v359
        %v361 = vpop.f32.mrf.mxu0
        %v362 = vadd.f32 %v279, %v361
        %363 = vmatprep.mubr.f32.mxu0 0.0
        %364 = vmatmul.mubr.f32.gmra.mxu0 %v208
        %v365 = vpop.f32.mrf.mxu0
        %v366 = vadd.f32 %v275, %v365
        %v367 = vpop.f32.mrf.mxu0
        %v368 = vadd.f32 %v279, %v367
        %369 = vmatprep.mubr.f32.mxu0 0.0
        %370 = vmatmul.mubr.f32.gmra.mxu0 %v209
        %v371 = vpop.f32.mrf.mxu0
        %v372 = vadd.f32 %v275, %v371
        %v373 = vpop.f32.mrf.mxu0
        %v374 = vadd.f32 %v279, %v373
        %375 = vmatprep.mubr.f32.mxu0 0.0
        %376 = vmatmul.mubr.f32.gmra.mxu0 %v210
        %v377 = vpop.f32.mrf.mxu0
        %v378 = vadd.f32 %v275, %v377
        %v379 = vpop.f32.mrf.mxu0
        %v380 = vadd.f32 %v279, %v379
        %381 = vmatprep.mubr.f32.mxu0 0.0
        %382 = vmatmul.mubr.f32.gmra.mxu0 %v211
        %v383 = vpop.f32.mrf.mxu0
        %v384 = vadd.f32 %v275, %v383
        %v385 = vpop.f32.mrf.mxu0
        %v386 = vadd.f32 %v279, %v385
        %387 = vmatprep.mubr.f32.mxu0 0.0
        %388 = vmatmul.mubr.f32.gmra.mxu0 %v212
        %v389 = vpop.f32.mrf.mxu0
        %v390 = vadd.f32 %v275, %v389
        %v391 = vpop.f32.mrf.mxu0
        %v392 = vadd.f32 %v279, %v391
        %393 = vmatprep.mubr.f32.mxu0 0.0
        %394 = vmatmul.mubr.f32.gmra.mxu0 %v213
        %v395 = vpop.f32.mrf.mxu0
        %v396 = vadd.f32 %v275, %v395
        %v397 = vpop.f32.mrf.mxu0
        %v398 = vadd.f32 %v279, %v397
        %399 = vmatprep.mubr.f32.mxu0 0.0
        %400 = vmatmul.mubr.f32.gmra.mxu0 %v214
        %v401 = vpop.f32.mrf.mxu0
        %v402 = vadd.f32 %v275, %v401
        %v403 = vpop.f32.mrf.mxu0
        %v404 = vadd.f32 %v279, %v403
        %405 = vmatprep.mubr.f32.mxu0 0.0
        %406 = vmatmul.mubr.f32.gmra.mxu0 %v215
        %v407 = vpop.f32.mrf.mxu0
        %v408 = vadd.f32 %v275, %v407
        %v409 = vpop.f32.mrf.mxu0
        %v410 = vadd.f32 %v279, %v409
        %411 = vmatprep.mubr.f32.mxu0 0.0
        %412 = vmatmul.mubr.f32.gmra.mxu0 %v216
        %v413 = vpop.f32.mrf.mxu0
        %v414 = vadd.f32 %v275, %v413
        %v415 = vpop.f32.mrf.mxu0
        %v416 = vadd.f32 %v279, %v415
        %417 = vmatprep.mubr.f32.mxu0 0.0
        %418 = vmatmul.mubr.f32.gmra.mxu0 %v217
        %v419 = vpop.f32.mrf.mxu0
        %v420 = vadd.f32 %v275, %v419
        %v421 = vpop.f32.mrf.mxu0
        %v422 = vadd.f32 %v279, %v421
        %423 = vmatprep.mubr.f32.mxu0 0.0
        %424 = vmatmul.mubr.f32.gmra.mxu0 %v218
        %v425 = vpop.f32.mrf.mxu0
        %v426 = vadd.f32 %v275, %v425
        %v427 = vpop.f32.mrf.mxu0
        %v428 = vadd.f32 %v279, %v427
        %429 = vmatprep.mubr.f32.mxu0 0.0
        %430 = vmatmul.mubr.f32.gmra.mxu0 %v219
        %v431 = vpop.f32.mrf.mxu0
        %v432 = vadd.f32 %v275, %v431
        %v433 = vpop.f32.mrf.mxu0
        %v434 = vadd.f32 %v279, %v433
        %435 = vmatprep.mubr.f32.mxu0 0.0
        %436 = vmatmul.mubr.f32.gmra.mxu0 %v220
        %v437 = vpop.f32.mrf.mxu0
        %v438 = vadd.f32 %v275, %v437
        %v439 = vpop.f32.mrf.mxu0
        %v440 = vadd.f32 %v279, %v439
        %441 = vmatprep.mubr.f32.mxu0 0.0
        %442 = vmatmul.mubr.f32.gmra.mxu0 %v221
        %v443 = vpop.f32.mrf.mxu0
        %v444 = vadd.f32 %v275, %v443
        %v445 = vpop.f32.mrf.mxu0
        %v446 = vadd.f32 %v279, %v445
        %447 = vdwg.mxu0
        %448 = vmatprep.subr.mxu0 0.0
        %449 = vmatpush1.msra.mxu0 %v269
        %450 = vmatprep.subr.mxu0 0.0
        %451 = vmatpush1.msra.mxu0 %v266
        %452 = vmatprep.subr.mxu0 0.0
        %453 = vmatpush1.msra.mxu0 %v263
        %454 = vmatprep.subr.mxu0 0.0
        %455 = vmatpush1.msra.mxu0 %v260
        %456 = vmatprep.subr.mxu0 0.0
        %457 = vmatpush1.msra.mxu0 %v257
        %458 = vmatprep.subr.mxu0 0.0
        %459 = vmatpush1.msra.mxu0 %v254
        %460 = vmatprep.subr.mxu0 0.0
        %461 = vmatpush1.msra.mxu0 %v251
        %462 = vmatprep.subr.mxu0 0.0
        %463 = vmatpush1.msra.mxu0 %v248
        %464 = vmatprep.subr.mxu0 0.0
        %465 = vmatpush1.msra.mxu0 %v245
        %466 = vmatprep.subr.mxu0 0.0
        %467 = vmatpush1.msra.mxu0 %v242
        %468 = vmatprep.subr.mxu0 0.0
        %469 = vmatpush1.msra.mxu0 %v239
        %470 = vmatprep.subr.mxu0 0.0
        %471 = vmatpush1.msra.mxu0 %v236
        %472 = vmatprep.subr.mxu0 0.0
        %473 = vmatpush1.msra.mxu0 %v233
        %474 = vmatprep.subr.mxu0 0.0
        %475 = vmatpush1.msra.mxu0 %v230
        %476 = vmatprep.subr.mxu0 0.0
        %477 = vmatpush1.msra.mxu0 %v227
        %478 = vmatprep.subr.mxu0 0.0
        %479 = vmatpush1.msra.mxu0 %v224
        %480 = vmatprep.subr.mxu0 0.0
        %481 = vmatpush2.msra.mxu0 0.0
        %482 = vmatprep.subr.mxu0 0.0
        %483 = vmatpush2.msra.mxu0 0.0
        %484 = vmatprep.subr.mxu0 0.0
        %485 = vmatpush2.msra.mxu0 0.0
        %486 = vmatprep.subr.mxu0 0.0
        %487 = vmatpush2.msra.mxu0 0.0
        %488 = vmatprep.subr.mxu0 0.0
        %489 = vmatpush2.msra.mxu0 0.0
        %490 = vmatprep.subr.mxu0 0.0
        %491 = vmatpush2.msra.mxu0 0.0
        %492 = vmatprep.subr.mxu0 0.0
        %493 = vmatpush2.msra.mxu0 0.0
        %494 = vmatprep.subr.mxu0 0.0
        %495 = vmatpush2.msra.mxu0 0.0
        %496 = vmatprep.subr.mxu0 0.0
        %497 = vmatpush2.msra.mxu0 0.0
        %498 = vmatprep.subr.mxu0 0.0
        %499 = vmatpush2.msra.mxu0 0.0
        %500 = vmatprep.subr.mxu0 0.0
        %501 = vmatpush2.msra.mxu0 0.0
        %502 = vmatprep.subr.mxu0 0.0
        %503 = vmatpush2.msra.mxu0 0.0
        %504 = vmatprep.subr.mxu0 0.0
        %505 = vmatpush2.msra.mxu0 0.0
        %506 = vmatprep.subr.mxu0 0.0
        %507 = vmatpush2.msra.mxu0 0.0
        %508 = vmatprep.subr.mxu0 0.0
        %509 = vmatpush2.msra.mxu0 0.0
        %510 = vmatprep.subr.mxu0 0.0
        %511 = vmatpush2.msra.mxu0 0.0
        %512 = vmatprep.mubr.f32.mxu0 0.0
        %513 = vmatmul.mubr.f32.gmra.mxu0 %v206
        %v514 = vpop.f32.mrf.mxu0
        %v515 = vadd.f32 %v283, %v514
        %v516 = vpop.f32.mrf.mxu0
        %517 = vmatprep.mubr.f32.mxu0 0.0
        %518 = vmatmul.mubr.f32.gmra.mxu0 %v207
        %v519 = vpop.f32.mrf.mxu0
        %v520 = vadd.f32 %v283, %v519
        %v521 = vpop.f32.mrf.mxu0
        %522 = vmatprep.mubr.f32.mxu0 0.0
        %523 = vmatmul.mubr.f32.gmra.mxu0 %v208
        %v524 = vpop.f32.mrf.mxu0
        %v525 = vadd.f32 %v283, %v524
        %v526 = vpop.f32.mrf.mxu0
        %527 = vmatprep.mubr.f32.mxu0 0.0
        %528 = vmatmul.mubr.f32.gmra.mxu0 %v209
        %v529 = vpop.f32.mrf.mxu0
        %v530 = vadd.f32 %v283, %v529
        %v531 = vpop.f32.mrf.mxu0
        %532 = vmatprep.mubr.f32.mxu0 0.0
        %533 = vmatmul.mubr.f32.gmra.mxu0 %v210
        %v534 = vpop.f32.mrf.mxu0
        %v535 = vadd.f32 %v283, %v534
        %v536 = vpop.f32.mrf.mxu0
        %537 = vmatprep.mubr.f32.mxu0 0.0
        %538 = vmatmul.mubr.f32.gmra.mxu0 %v211
        %v539 = vpop.f32.mrf.mxu0
        %v540 = vadd.f32 %v283, %v539
        %v541 = vpop.f32.mrf.mxu0
        %542 = vmatprep.mubr.f32.mxu0 0.0
        %543 = vmatmul.mubr.f32.gmra.mxu0 %v212
        %v544 = vpop.f32.mrf.mxu0
        %v545 = vadd.f32 %v283, %v544
        %v546 = vpop.f32.mrf.mxu0
        %547 = vmatprep.mubr.f32.mxu0 0.0
        %548 = vmatmul.mubr.f32.gmra.mxu0 %v213
        %v549 = vpop.f32.mrf.mxu0
        %v550 = vadd.f32 %v283, %v549
        %v551 = vpop.f32.mrf.mxu0
        %552 = vmatprep.mubr.f32.mxu0 0.0
        %553 = vmatmul.mubr.f32.gmra.mxu0 %v214
        %v554 = vpop.f32.mrf.mxu0
        %v555 = vadd.f32 %v283, %v554
        %v556 = vpop.f32.mrf.mxu0
        %557 = vmatprep.mubr.f32.mxu0 0.0
        %558 = vmatmul.mubr.f32.gmra.mxu0 %v215
        %v559 = vpop.f32.mrf.mxu0
        %v560 = vadd.f32 %v283, %v559
        %v561 = vpop.f32.mrf.mxu0
        %562 = vmatprep.mubr.f32.mxu0 0.0
        %563 = vmatmul.mubr.f32.gmra.mxu0 %v216
        %v564 = vpop.f32.mrf.mxu0
        %v565 = vadd.f32 %v283, %v564
        %v566 = vpop.f32.mrf.mxu0
        %567 = vmatprep.mubr.f32.mxu0 0.0
        %568 = vmatmul.mubr.f32.gmra.mxu0 %v217
        %v569 = vpop.f32.mrf.mxu0
        %v570 = vadd.f32 %v283, %v569
        %v571 = vpop.f32.mrf.mxu0
        %572 = vmatprep.mubr.f32.mxu0 0.0
        %573 = vmatmul.mubr.f32.gmra.mxu0 %v218
        %v574 = vpop.f32.mrf.mxu0
        %v575 = vadd.f32 %v283, %v574
        %v576 = vpop.f32.mrf.mxu0
        %577 = vmatprep.mubr.f32.mxu0 0.0
        %578 = vmatmul.mubr.f32.gmra.mxu0 %v219
        %v579 = vpop.f32.mrf.mxu0
        %v580 = vadd.f32 %v283, %v579
        %v581 = vpop.f32.mrf.mxu0
        %582 = vmatprep.mubr.f32.mxu0 0.0
        %583 = vmatmul.mubr.f32.gmra.mxu0 %v220
        %v584 = vpop.f32.mrf.mxu0
        %v585 = vadd.f32 %v283, %v584
        %v586 = vpop.f32.mrf.mxu0
        %587 = vmatprep.mubr.f32.mxu0 0.0
        %588 = vmatmul.mubr.f32.gmra.mxu0 %v221
        %v589 = vpop.f32.mrf.mxu0
        %v590 = vadd.f32 %v283, %v589
        %v591 = vpop.f32.mrf.mxu0
        %592 = vdwg.mxu0
        %593 = vst [vmem:[%s203] sm:$0xff] %v354
        %594 = vst [vmem:[%s203 + $0x8] sm:$0xff] %v356
        %595 = vst [vmem:[%s203 + $0x10] sm:$0xff] %v515
        %596 = vst [vmem:[%s203 + $0x18] sm:$0xff] %v360
        %597 = vst [vmem:[%s203 + $0x20] sm:$0xff] %v362
        %598 = vst [vmem:[%s203 + $0x28] sm:$0xff] %v520
        %599 = vst [vmem:[%s203 + $0x30] sm:$0xff] %v366
        %600 = vst [vmem:[%s203 + $0x38] sm:$0xff] %v368
        %601 = vst [vmem:[%s203 + $0x40] sm:$0xff] %v525
        %602 = vst [vmem:[%s203 + $0x48] sm:$0xff] %v372
        %603 = vst [vmem:[%s203 + $0x50] sm:$0xff] %v374
        %604 = vst [vmem:[%s203 + $0x58] sm:$0xff] %v530
        %605 = vst [vmem:[%s203 + $0x60] sm:$0xff] %v378
        %606 = vst [vmem:[%s203 + $0x68] sm:$0xff] %v380
        %607 = vst [vmem:[%s203 + $0x70] sm:$0xff] %v535
        %608 = vst [vmem:[%s203 + $0x78] sm:$0xff] %v384
        %609 = vst [vmem:[%s203 + $0x80] sm:$0xff] %v386
        %610 = vst [vmem:[%s203 + $0x88] sm:$0xff] %v540
        %611 = vst [vmem:[%s203 + $0x90] sm:$0xff] %v390
        %612 = vst [vmem:[%s203 + $0x98] sm:$0xff] %v392
        %613 = vst [vmem:[%s203 + $0xa0] sm:$0xff] %v545
        %614 = vst [vmem:[%s203 + $0xa8] sm:$0xff] %v396
        %615 = vst [vmem:[%s203 + $0xb0] sm:$0xff] %v398
        %616 = vst [vmem:[%s203 + $0xb8] sm:$0xff] %v550
        %617 = vst [vmem:[%s203 + $0xc0] sm:$0xff] %v402
        %618 = vst [vmem:[%s203 + $0xc8] sm:$0xff] %v404
        %619 = vst [vmem:[%s203 + $0xd0] sm:$0xff] %v555
        %620 = vst [vmem:[%s203 + $0xd8] sm:$0xff] %v408
        %621 = vst [vmem:[%s203 + $0xe0] sm:$0xff] %v410
        %622 = vst [vmem:[%s203 + $0xe8] sm:$0xff] %v560
        %623 = vst [vmem:[%s203 + $0xf0] sm:$0xff] %v414
        %624 = vst [vmem:[%s203 + $0xf8] sm:$0xff] %v416
        %625 = vst [vmem:[%s203 + $0x100] sm:$0xff] %v565
        %626 = vst [vmem:[%s203 + $0x108] sm:$0xff] %v420
        %627 = vst [vmem:[%s203 + $0x110] sm:$0xff] %v422
        %628 = vst [vmem:[%s203 + $0x118] sm:$0xff] %v570
        %629 = vst [vmem:[%s203 + $0x120] sm:$0xff] %v426
        %630 = vst [vmem:[%s203 + $0x128] sm:$0xff] %v428
        %631 = vst [vmem:[%s203 + $0x130] sm:$0xff] %v575
        %632 = vst [vmem:[%s203 + $0x138] sm:$0xff] %v432
        %633 = vst [vmem:[%s203 + $0x140] sm:$0xff] %v434
        %634 = vst [vmem:[%s203 + $0x148] sm:$0xff] %v580
        %635 = vst [vmem:[%s203 + $0x150] sm:$0xff] %v438
        %636 = vst [vmem:[%s203 + $0x158] sm:$0xff] %v440
        %637 = vst [vmem:[%s203 + $0x160] sm:$0xff] %v585
        %638 = vst [vmem:[%s203 + $0x168] sm:$0xff] %v444
        %639 = vst [vmem:[%s203 + $0x170] sm:$0xff] %v446
        %640 = vst [vmem:[%s203 + $0x178] sm:$0xff] %v590
        %s641 = sand.u32 %s97, 1
        %s642 = scalar_lea.sflag [#allocation4], %s641
        %s643 = sand.u32 %s97, 1
        %s644 = smul.addr %s643, 384
        %s645 = scalar_lea.vmem [#allocation7], %s644
        // Predicated region
        $region41: #{tpu_custom_call.1} parent=31 // pred_check
          %p646 = pneg %p107
        $region42: #{tpu_custom_call.1} parent=31 // pred_check_branch
          %648 = sbr.rel (%p646) target = $region44
        $region43: #{tpu_custom_call.1} parent=31 // pred_region
          %s649 = smul.u32 16, %s21
          %s651 = ssub.s32 6144, 6144
          %652 = vsyncadd %s642, %s651
          %s653 = smul.addr %s649, 3
          %s654 = smul.addr %s653, 128
          %s655 = scalar_lea.hbm %s3, %s654
          %s656 = sshll.u32 %s645, 4
          %s657 = int_to_ptr.vmem [resolvable:$true] %s656
          %662 = dma.vmem_to_hbm [thread:$0]  %s657, 6144, %s655, %s642, 384, 384, 24
        $region44: #{tpu_custom_call.1} parent=31 // pred_fallthru
          _
      $region32: #{tpu_custom_call.1} parent=5 // pred_fallthru
        _
      %p663 = scmp.le.s32.totalorder 2, %s16
      // Predicated region
      $region45: #{tpu_custom_call.1} parent=5 // pred_check
        %p664 = pneg %p663
      $region46: #{tpu_custom_call.1} parent=5 // pred_check_branch
        %666 = sbr.rel (%p664) target = $region48
      $region47: #{tpu_custom_call.1} parent=5 // pred_region
        %s667 = ssub.s32 %s16, 2
        // Predicated region
        $region49: #{tpu_custom_call.1} parent=47 // pred_check
          %p668 = pneg %p113
        $region50: #{tpu_custom_call.1} parent=47 // pred_check_branch
          %670 = sbr.rel (%p668) target = $region52
        $region51: #{tpu_custom_call.1} parent=47 // pred_region
          %s671 = sand.u32 %s98, 1
          %s672 = scalar_lea.sflag [#allocation4], %s671
          %s673 = sand.u32 %s98, 1
          %s674 = smul.addr %s673, 384
          %s675 = scalar_lea.vmem [#allocation7], %s674
          %676 = dma.done %s672, 6144
        $region52: #{tpu_custom_call.1} parent=47 // pred_fallthru
          _
      $region48: #{tpu_custom_call.1} parent=5 // pred_fallthru
        _
    $region6: #{tpu_custom_call.1} parent=1 // loop_footer
      %s20 = sadd.s32 1, %s16
    $region7: #{tpu_custom_call.1} parent=1 // loop_footer_branch
      %15 = sbr.rel target = $region3
    $region8: #{tpu_custom_call.1} parent=1 // loop_exit
      _
    %677 = vsyncpa [#allocation3], 1
    %s678 = scalar_lea.sflag [#allocation3], 1
    %679 = vsyncpa %s678, 1
    %680 = vsyncpa [#allocation6], 1
    %681 = vsyncpa [#allocation4], 1
    %s682 = scalar_lea.sflag [#allocation4], 1
    %683 = vsyncpa %s682, 1

</llo_original>
